<compile_context>
chip_gen: v5e
topology: v5e:2x2
jax: 0.10.0
libtpu: 0.0.40
codegen_flags: <defaults>
</compile_context>

<pallas_src>
import jax
import jax.numpy as jnp
from jax.experimental import pallas as pl
from jax.experimental.pallas import tpu as pltpu

INPUT_DIM = 7
LAYER_DIMS = [INPUT_DIM, 64, 32, 16, 32, 64, INPUT_DIM]
NUM_LAYERS = len(LAYER_DIMS) - 1      # 6 Linear layers
PAD = 128                             # every feature dim padded to one lane width
TM_MAX = 4096                         # max batch tile (fits scoped VMEM with margin)


def _bf16_epilogue_supported():
    """bf16-native VPU (v6e / v7x).  v5e and older keep the epilogue in f32."""
    try:
        kind = jax.devices()[0].device_kind.lower()
    except Exception:
        return False
    return not any(t in kind for t in ("v2", "v3", "v4", "v5"))


_EPILOGUE_DTYPE = jnp.bfloat16 if _bf16_epilogue_supported() else jnp.float32


def _autoencoder_kernel(x_ref, w_ref, o_ref):
    tm = x_ref.shape[0]

    # Register-pad the (TM, 7) tile to (TM, 128): lanes 7..126 are zero,
    # lane 127 carries the constant 1.0 multiplied by the folded bias rows.
    x = x_ref[...]                                                    # (TM, 7) f32
    h = jnp.concatenate(
        [x, jnp.zeros((tm, PAD - INPUT_DIM), jnp.float32)], axis=-1)  # (TM, 128)
    lane = jax.lax.broadcasted_iota(jnp.int32, (tm, PAD), 1)
    h = jnp.where(lane == PAD - 1, 1.0, h).astype(jnp.bfloat16)

    for l in range(NUM_LAYERS):
        # bf16 MXU operands, f32 accumulation; bias already folded into row 127.
        y = jnp.dot(h, w_ref[l], preferred_element_type=jnp.float32)
        if l < NUM_LAYERS - 1:
            ya = y.astype(_EPILOGUE_DTYPE)                 # bf16 epilogue on v6e/v7x
            h = jnp.where(ya > 0, ya, 0.01 * ya).astype(jnp.bfloat16)  # LeakyReLU
        else:
            z = y[:, :INPUT_DIM]                           # only useful lanes stored
            # sigmoid; the divide goes to the EUP slot.
            o_ref[...] = pl.reciprocal(1.0 + jnp.exp(-z), approx=True)


def init_params(key):
    """PyTorch nn.Linear default init: U(-1/sqrt(fan_in), +1/sqrt(fan_in))."""
    params = []
    for i in range(NUM_LAYERS):
        fan_in, fan_out = LAYER_DIMS[i], LAYER_DIMS[i + 1]
        key, kw, kb = jax.random.split(key, 3)
        bound = 1.0 / (fan_in ** 0.5)
        # Stored transposed (in, out): forward is x @ w + b (== x @ W.T + b in torch).
        w = jax.random.uniform(kw, (fan_in, fan_out), jnp.float32, -bound, bound)
        b = jax.random.uniform(kb, (fan_out,), jnp.float32, -bound, bound)
        params.append((w, b))
    return params


def pack_params(params):
    """Pad each layer to (128,128), fold bias into row 127, stack, cast to bf16.

    Invariants this relies on (checked in __main__): fan_in, fan_out <= 64 so
    row/column 127 never overlap real weights; the kernel's padded activation
    carries 1.0 in lane 127; LeakyReLU(1) == 1 keeps that lane alive; the last
    layer only reads output lanes 0:7.  Call once outside the hot path.
    """
    blocks = []
    for li, (w, b) in enumerate(params):
        fan_in, fan_out = w.shape
        wp = jnp.zeros((PAD, PAD), jnp.float32)
        wp = wp.at[:fan_in, :fan_out].set(w)
        wp = wp.at[PAD - 1, :fan_out].set(b)          # bias row (homogeneous trick)
        if li < NUM_LAYERS - 1:
            wp = wp.at[PAD - 1, PAD - 1].set(1.0)     # propagate the ones-lane
        blocks.append(wp)
    return jnp.stack(blocks).astype(jnp.bfloat16)      # (6, 128, 128) bf16


def _choose_tile(batch):
    """>= 2 grid steps whenever possible (v7x megacore); tile capped at TM_MAX."""
    if batch <= 8:
        return 8
    half = -(-batch // 2)                 # ceil(batch / 2)
    tm = ((half + 7) // 8) * 8            # round up to sublane multiple
    return min(tm, TM_MAX)


@jax.jit
def enhanced_autoencoder(x, w_packed):
    """x: (batch, 7) -> (batch, 7) f32; same forward as EnhancedAutoencoder."""
    batch = x.shape[0]
    tm = _choose_tile(batch)
    bpad = ((batch + tm - 1) // tm) * tm

    x_p = x.astype(jnp.float32)
    if bpad != batch:
        x_p = jnp.pad(x_p, ((0, bpad - batch), (0, 0)))

    grid = (bpad // tm,)
    flops = 2 * NUM_LAYERS * bpad * PAD * PAD
    bytes_accessed = (x_p.size + bpad * INPUT_DIM) * 4 + w_packed.size * 2

    out = pl.pallas_call(
        _autoencoder_kernel,
        out_shape=jax.ShapeDtypeStruct((bpad, INPUT_DIM), jnp.float32),
        grid=grid,
        in_specs=[
            pl.BlockSpec((tm, INPUT_DIM), lambda i: (i, 0)),             # x tile
            pl.BlockSpec((NUM_LAYERS, PAD, PAD), lambda i: (0, 0, 0)),   # weights (resident)
        ],
        out_specs=pl.BlockSpec((tm, INPUT_DIM), lambda i: (i, 0)),
        compiler_params=pltpu.CompilerParams(
            dimension_semantics=("parallel",),
            vmem_limit_bytes=48 * 1024 * 1024),
        cost_estimate=pl.CostEstimate(
            flops=flops,
            transcendentals=bpad * INPUT_DIM,
            bytes_accessed=bytes_accessed),
    )(x_p, w_packed)

    if bpad != batch:
        out = out[:batch]
    return out


def _reference(x, params):
    h = x.astype(jnp.float32)
    for li, (w, b) in enumerate(params):
        h = h @ w + b
        if li < len(params) - 1:
            h = jnp.where(h > 0, h, 0.01 * h)
        else:
            h = jax.nn.sigmoid(h)
    return h


if __name__ == "__main__":
    key = jax.random.PRNGKey(0)
    kp, kx1, kx2 = jax.random.split(key, 3)

    params = init_params(kp)
    w_packed = pack_params(params)

    # small single-tile batch
    x1 = jax.random.normal(kx1, (8, INPUT_DIM), jnp.float32)
    y1 = enhanced_autoencoder(x1, w_packed)
    jax.block_until_ready(y1)
    assert y1.shape == (8, INPUT_DIM)
    assert jnp.allclose(y1, _reference(x1, params), atol=2e-2, rtol=2e-2), \
        "mismatch vs reference (small batch)"

    # non-aligned batch: exercises the 2-step grid + row padding / slicing path
    x2 = jax.random.normal(kx2, (35, INPUT_DIM), jnp.float32)
    y2 = enhanced_autoencoder(x2, w_packed)
    jax.block_until_ready(y2)
    assert y2.shape == (35, INPUT_DIM)
    assert jnp.allclose(y2, _reference(x2, params), atol=2e-2, rtol=2e-2), \
        "mismatch vs reference (tiled batch)"

    # Invariant check for the bias-folding / ones-lane trick, independent of the
    # kernel: an f32 emulation of the packed forward must match the reference.
    def _packed_forward_f32(x):
        h = jnp.zeros((x.shape[0], PAD), jnp.float32).at[:, :INPUT_DIM].set(x)
        h = h.at[:, PAD - 1].set(1.0)
        wf = w_packed.astype(jnp.float32)
        for l in range(NUM_LAYERS):
            h = h @ wf[l]
            if l < NUM_LAYERS - 1:
                h = jnp.where(h > 0, h, 0.01 * h)
        return jax.nn.sigmoid(h[:, :INPUT_DIM])

    assert jnp.allclose(_packed_forward_f32(x1), _reference(x1, params),
                        atol=1e-2, rtol=1e-2), "bias-folding invariant violated"

    print("KERNEL_OK")
</pallas_src>

<mosaic_0001>
module attributes {stable_mosaic.version = 11 : i64} {
  func.func @_autoencoder_kernel(%arg0: i32, %arg1: memref<8x7xf32, #tpu.memory_space<vmem>>, %arg2: memref<6x128x128xbf16, #tpu.memory_space<vmem>>, %arg3: memref<8x7xf32, #tpu.memory_space<vmem>>) attributes {dimension_semantics = [#tpu.dimension_semantics<parallel>], iteration_bounds = array<i64: 1>, scalar_prefetch = 0 : i64, scratch_operands = 0 : i64, tpu.core_type = #tpu.core_type<tc>, window_params = [{transform_indices = @transform_0, window_bounds = array<i64: 8, 7>}, {pipeline_mode = #tpu.pipeline_mode<synchronous>, transform_indices = @transform_1, window_bounds = array<i64: 6, 128, 128>}, {transform_indices = @transform_2, window_bounds = array<i64: 8, 7>}]} {
    %c0 = arith.constant 0 : index
    %c0_0 = arith.constant 0 : index
    %0 = vector.load %arg1[%c0, %c0_0] : memref<8x7xf32, #tpu.memory_space<vmem>>, vector<8x7xf32>
    %cst = arith.constant 0.000000e+00 : f32
    %1 = vector.broadcast %cst : f32 to vector<8x121xf32>
    %2 = tpu.concatenate %0, %1 in 1 : vector<8x7xf32>, vector<8x121xf32> -> vector<8x128xf32>
    %3 = tpu.iota {dimensions = array<i32: 1>} : vector<8x128xi32>
    %c127_i32 = arith.constant 127 : i32
    %4 = vector.broadcast %c127_i32 : i32 to vector<8x128xi32>
    %5 = arith.cmpi eq, %3, %4 : vector<8x128xi32>
    %cst_1 = arith.constant 1.000000e+00 : f32
    %6 = vector.broadcast %cst_1 : f32 to vector<8x128xf32>
    %7 = arith.select %5, %6, %2 : vector<8x128xi1>, vector<8x128xf32>
    %8 = arith.truncf %7 : vector<8x128xf32> to vector<8x128xbf16>
    %c0_2 = arith.constant 0 : index
    %c0_3 = arith.constant 0 : index
    %c0_4 = arith.constant 0 : index
    %9 = vector.load %arg2[%c0_2, %c0_3, %c0_4] : memref<6x128x128xbf16, #tpu.memory_space<vmem>>, vector<1x128x128xbf16>
    %10 = vector.shape_cast %9 : vector<1x128x128xbf16> to vector<128x128xbf16>
    %cst_5 = arith.constant dense<0.000000e+00> : vector<8x128xf32>
    %11 = tpu.matmul %8, %10, %cst_5 {dimension_numbers = #tpu.dot_dimension_numbers<[1], [0], [0], [1], [0, 0, 1, 1], [], []>} : vector<8x128xbf16>, vector<128x128xbf16>, vector<8x128xf32> -> vector<8x128xf32>
    %12 = arith.truncf %11 : vector<8x128xf32> to vector<8x128xbf16>
    %cst_6 = arith.constant 0.000000e+00 : bf16
    %13 = vector.broadcast %cst_6 : bf16 to vector<8x128xbf16>
    %14 = arith.cmpf ogt, %12, %13 : vector<8x128xbf16>
    %cst_7 = arith.constant 1.000980e-02 : bf16
    %15 = vector.broadcast %cst_7 : bf16 to vector<8x128xbf16>
    %16 = arith.mulf %15, %12 : vector<8x128xbf16>
    %17 = arith.select %14, %12, %16 : vector<8x128xi1>, vector<8x128xbf16>
    %c1 = arith.constant 1 : index
    %c0_8 = arith.constant 0 : index
    %c0_9 = arith.constant 0 : index
    %18 = vector.load %arg2[%c1, %c0_8, %c0_9] : memref<6x128x128xbf16, #tpu.memory_space<vmem>>, vector<1x128x128xbf16>
    %19 = vector.shape_cast %18 : vector<1x128x128xbf16> to vector<128x128xbf16>
    %cst_10 = arith.constant dense<0.000000e+00> : vector<8x128xf32>
    %20 = tpu.matmul %17, %19, %cst_10 {dimension_numbers = #tpu.dot_dimension_numbers<[1], [0], [0], [1], [0, 0, 1, 1], [], []>} : vector<8x128xbf16>, vector<128x128xbf16>, vector<8x128xf32> -> vector<8x128xf32>
    %21 = arith.truncf %20 : vector<8x128xf32> to vector<8x128xbf16>
    %cst_11 = arith.constant 0.000000e+00 : bf16
    %22 = vector.broadcast %cst_11 : bf16 to vector<8x128xbf16>
    %23 = arith.cmpf ogt, %21, %22 : vector<8x128xbf16>
    %cst_12 = arith.constant 1.000980e-02 : bf16
    %24 = vector.broadcast %cst_12 : bf16 to vector<8x128xbf16>
    %25 = arith.mulf %24, %21 : vector<8x128xbf16>
    %26 = arith.select %23, %21, %25 : vector<8x128xi1>, vector<8x128xbf16>
    %c2 = arith.constant 2 : index
    %c0_13 = arith.constant 0 : index
    %c0_14 = arith.constant 0 : index
    %27 = vector.load %arg2[%c2, %c0_13, %c0_14] : memref<6x128x128xbf16, #tpu.memory_space<vmem>>, vector<1x128x128xbf16>
    %28 = vector.shape_cast %27 : vector<1x128x128xbf16> to vector<128x128xbf16>
    %cst_15 = arith.constant dense<0.000000e+00> : vector<8x128xf32>
    %29 = tpu.matmul %26, %28, %cst_15 {dimension_numbers = #tpu.dot_dimension_numbers<[1], [0], [0], [1], [0, 0, 1, 1], [], []>} : vector<8x128xbf16>, vector<128x128xbf16>, vector<8x128xf32> -> vector<8x128xf32>
    %30 = arith.truncf %29 : vector<8x128xf32> to vector<8x128xbf16>
    %cst_16 = arith.constant 0.000000e+00 : bf16
    %31 = vector.broadcast %cst_16 : bf16 to vector<8x128xbf16>
    %32 = arith.cmpf ogt, %30, %31 : vector<8x128xbf16>
    %cst_17 = arith.constant 1.000980e-02 : bf16
    %33 = vector.broadcast %cst_17 : bf16 to vector<8x128xbf16>
    %34 = arith.mulf %33, %30 : vector<8x128xbf16>
    %35 = arith.select %32, %30, %34 : vector<8x128xi1>, vector<8x128xbf16>
    %c3 = arith.constant 3 : index
    %c0_18 = arith.constant 0 : index
    %c0_19 = arith.constant 0 : index
    %36 = vector.load %arg2[%c3, %c0_18, %c0_19] : memref<6x128x128xbf16, #tpu.memory_space<vmem>>, vector<1x128x128xbf16>
    %37 = vector.shape_cast %36 : vector<1x128x128xbf16> to vector<128x128xbf16>
    %cst_20 = arith.constant dense<0.000000e+00> : vector<8x128xf32>
    %38 = tpu.matmul %35, %37, %cst_20 {dimension_numbers = #tpu.dot_dimension_numbers<[1], [0], [0], [1], [0, 0, 1, 1], [], []>} : vector<8x128xbf16>, vector<128x128xbf16>, vector<8x128xf32> -> vector<8x128xf32>
    %39 = arith.truncf %38 : vector<8x128xf32> to vector<8x128xbf16>
    %cst_21 = arith.constant 0.000000e+00 : bf16
    %40 = vector.broadcast %cst_21 : bf16 to vector<8x128xbf16>
    %41 = arith.cmpf ogt, %39, %40 : vector<8x128xbf16>
    %cst_22 = arith.constant 1.000980e-02 : bf16
    %42 = vector.broadcast %cst_22 : bf16 to vector<8x128xbf16>
    %43 = arith.mulf %42, %39 : vector<8x128xbf16>
    %44 = arith.select %41, %39, %43 : vector<8x128xi1>, vector<8x128xbf16>
    %c4 = arith.constant 4 : index
    %c0_23 = arith.constant 0 : index
    %c0_24 = arith.constant 0 : index
    %45 = vector.load %arg2[%c4, %c0_23, %c0_24] : memref<6x128x128xbf16, #tpu.memory_space<vmem>>, vector<1x128x128xbf16>
    %46 = vector.shape_cast %45 : vector<1x128x128xbf16> to vector<128x128xbf16>
    %cst_25 = arith.constant dense<0.000000e+00> : vector<8x128xf32>
    %47 = tpu.matmul %44, %46, %cst_25 {dimension_numbers = #tpu.dot_dimension_numbers<[1], [0], [0], [1], [0, 0, 1, 1], [], []>} : vector<8x128xbf16>, vector<128x128xbf16>, vector<8x128xf32> -> vector<8x128xf32>
    %48 = arith.truncf %47 : vector<8x128xf32> to vector<8x128xbf16>
    %cst_26 = arith.constant 0.000000e+00 : bf16
    %49 = vector.broadcast %cst_26 : bf16 to vector<8x128xbf16>
    %50 = arith.cmpf ogt, %48, %49 : vector<8x128xbf16>
    %cst_27 = arith.constant 1.000980e-02 : bf16
    %51 = vector.broadcast %cst_27 : bf16 to vector<8x128xbf16>
    %52 = arith.mulf %51, %48 : vector<8x128xbf16>
    %53 = arith.select %50, %48, %52 : vector<8x128xi1>, vector<8x128xbf16>
    %c5 = arith.constant 5 : index
    %c0_28 = arith.constant 0 : index
    %c0_29 = arith.constant 0 : index
    %54 = vector.load %arg2[%c5, %c0_28, %c0_29] : memref<6x128x128xbf16, #tpu.memory_space<vmem>>, vector<1x128x128xbf16>
    %55 = vector.shape_cast %54 : vector<1x128x128xbf16> to vector<128x128xbf16>
    %cst_30 = arith.constant dense<0.000000e+00> : vector<8x128xf32>
    %56 = tpu.matmul %53, %55, %cst_30 {dimension_numbers = #tpu.dot_dimension_numbers<[1], [0], [0], [1], [0, 0, 1, 1], [], []>} : vector<8x128xbf16>, vector<128x128xbf16>, vector<8x128xf32> -> vector<8x128xf32>
    %57 = vector.extract_strided_slice %56 {offsets = [0, 0], sizes = [8, 7], strides = [1, 1]} : vector<8x128xf32> to vector<8x7xf32>
    %cst_31 = arith.constant 0.000000e+00 : f32
    %58 = vector.broadcast %cst_31 : f32 to vector<8x7xf32>
    %59 = arith.subf %58, %57 : vector<8x7xf32>
    %60 = math.exp %59 : vector<8x7xf32>
    %cst_32 = arith.constant 1.000000e+00 : f32
    %61 = vector.broadcast %cst_32 : f32 to vector<8x7xf32>
    %62 = arith.addf %61, %60 : vector<8x7xf32>
    %63 = tpu.reciprocal %62 {approx = true} : vector<8x7xf32> -> vector<8x7xf32>
    %c0_33 = arith.constant 0 : index
    %c0_34 = arith.constant 0 : index
    %64 = vector.load %arg3[%c0_33, %c0_34] : memref<8x7xf32, #tpu.memory_space<vmem>>, vector<8x7xf32>
    tpu.vector_store %arg3[%c0_33, %c0_34], %63 {strides = array<i32>} : memref<8x7xf32, #tpu.memory_space<vmem>>, vector<8x7xf32>,
    return
  }
  func.func @transform_0(%arg0: i32) -> (i32, i32) {
    %c0_i32 = arith.constant 0 : i32
    %c0_i32_0 = arith.constant 0 : i32
    return %arg0, %c0_i32 : i32, i32
  }
  func.func @transform_1(%arg0: i32) -> (i32, i32, i32) {
    %c0_i32 = arith.constant 0 : i32
    %c0_i32_0 = arith.constant 0 : i32
    %c0_i32_1 = arith.constant 0 : i32
    %c0_i32_2 = arith.constant 0 : i32
    return %c0_i32, %c0_i32_0, %c0_i32_1 : i32, i32, i32
  }
  func.func @transform_2(%arg0: i32) -> (i32, i32) {
    %c0_i32 = arith.constant 0 : i32
    %c0_i32_0 = arith.constant 0 : i32
    return %arg0, %c0_i32 : i32, i32
  }
}

</mosaic_0001>

<llo_original>
// kernel: enhanced_autoencoder.1
$region0: #{enhanced_autoencoder.1}
  #allocation0 [shape = 'u32[]', space=smem, size = 0x4, offset = 0x4, fixed_abs, tag = 'smem constant byte address 0x4 - core index']
  #allocation1 [shape = 'u32[72,128]{1,0:T(1,128)}', space=vmem, size = 0x9000, scoped, tag = 'internal scratch']
  %s0 = inlined_call_operand.hbm [shape: f32[8,7], index: 0, kind: input, shape index: {}]
  %s1 = inlined_call_operand.hbm [shape: bf16[6,128,128], index: 1, kind: input, shape index: {}]
  %s2 = inlined_call_operand.hbm [shape: f32[8,7], index: 2, kind: output, shape index: {}]
  %s3 = sld [smem:[#allocation0]]
  $region26: #{enhanced_autoencoder.1} parent=0
    _
  %s5 = ssub.s32 1, %s3
  %s6 = scalar_select 0, %s5, %s3
  $region1: #{enhanced_autoencoder.1} parent=0
    #allocation2 [shape = 'u8[4096]{0}', space=vmem, size = 0x1000, scoped, tag = 'input window, operand 0, single buffered']
    #allocation3 [shape = 's32[1]{0}', space=sflag, size = 0x4, scoped, tag = 'scoped memory for enhanced_autoencoder.1']
    #allocation4 [shape = 's32[1]{0}', space=sflag, size = 0x4, scoped, tag = 'scoped memory for enhanced_autoencoder.1']
    #allocation5 [shape = 'u8[196608]{0}', space=vmem, size = 0x30000, scoped, tag = 'input window, operand 1, single buffered']
    #allocation6 [shape = 's32[1]{0}', space=sflag, size = 0x4, scoped, tag = 'scoped memory for enhanced_autoencoder.1']
    #allocation7 [shape = 'u8[4096]{0}', space=vmem, size = 0x1000, scoped, tag = 'output window, operand 0, single buffered']
    %7 = vsyncpa [#allocation3], 0
    %8 = vsyncpa [#allocation6], 0
    %9 = vsyncpa [#allocation4], 0
    // Predicated region
    $region2: #{enhanced_autoencoder.1} parent=1 // pred_check
      _
    $region3: #{enhanced_autoencoder.1} parent=1 // pred_check_branch
      %11 = sbr.rel (0) target = $region5
    $region4: #{enhanced_autoencoder.1} parent=1 // pred_region
      %13 = vsyncadd [#allocation3], 0
      %s15 = sshll.u32 %s0, 4
      %s16 = int_to_ptr.hbm [resolvable:$true] %s15
      %s17 = sshll.u32 [#allocation2], 4
      %s18 = int_to_ptr.vmem [resolvable:$true] %s17
      %20 = dma.hbm_to_vmem [thread:$0]  %s16, 128, %s18, [#allocation3]
    $region5: #{enhanced_autoencoder.1} parent=1 // pred_fallthru
      _
    // Predicated region
    $region6: #{enhanced_autoencoder.1} parent=1 // pred_check
      _
    $region7: #{enhanced_autoencoder.1} parent=1 // pred_check_branch
      %22 = sbr.rel (0) target = $region9
    $region8: #{enhanced_autoencoder.1} parent=1 // pred_region
      %24 = vsyncadd [#allocation6], 0
      %s25 = sshll.u32 %s1, 4
      %s26 = int_to_ptr.hbm [resolvable:$true] %s25
      %s27 = sshll.u32 [#allocation5], 4
      %s28 = int_to_ptr.vmem [resolvable:$true] %s27
      %33 = dma.hbm_to_vmem [thread:$0]  %s26, 6144, %s28, [#allocation6], 64, 64, 4
    $region9: #{enhanced_autoencoder.1} parent=1 // pred_fallthru
      _
    // Predicated region
    $region10: #{enhanced_autoencoder.1} parent=1 // pred_check
      _
    $region11: #{enhanced_autoencoder.1} parent=1 // pred_check_branch
      %35 = sbr.rel (0) target = $region13
    $region12: #{enhanced_autoencoder.1} parent=1 // pred_region
      %37 = dma.done [#allocation3], 128
    $region13: #{enhanced_autoencoder.1} parent=1 // pred_fallthru
      _
    // Predicated region
    $region14: #{enhanced_autoencoder.1} parent=1 // pred_check
      _
    $region15: #{enhanced_autoencoder.1} parent=1 // pred_check_branch
      %39 = sbr.rel (0) target = $region17
    $region16: #{enhanced_autoencoder.1} parent=1 // pred_region
      %41 = dma.done [#allocation6], 6144
    $region17: #{enhanced_autoencoder.1} parent=1 // pred_fallthru
      _
    %v42 = vld [vmem:[#allocation2] sm:$0xff]
    %vm43 = vcmask 56320
    %v44 = vsel %vm43, %v42, 0.0
    %v45 = vlaneseq
    %v46 = vand.u32 %v45, 127
    %vm47 = vcmp.eq.s32.totalorder %v46, 127
    %v48 = vsel %vm47, 1.0, %v44
    %v49 = vpack.c.bf16 %v48, %v48
    %v50 = vld [vmem:[#allocation5] sm:$0xf]
    %v51 = vld [vmem:[#allocation5 + $0x4] sm:$0xf]
    %v52 = vld [vmem:[#allocation5 + $0x8] sm:$0xf]
    %v53 = vld [vmem:[#allocation5 + $0xc] sm:$0xf]
    %v54 = vld [vmem:[#allocation5 + $0x10] sm:$0xf]
    %v55 = vld [vmem:[#allocation5 + $0x14] sm:$0xf]
    %v56 = vld [vmem:[#allocation5 + $0x18] sm:$0xf]
    %v57 = vld [vmem:[#allocation5 + $0x1c] sm:$0xf]
    %v58 = vld [vmem:[#allocation5 + $0x20] sm:$0xf]
    %v59 = vld [vmem:[#allocation5 + $0x24] sm:$0xf]
    %v60 = vld [vmem:[#allocation5 + $0x28] sm:$0xf]
    %v61 = vld [vmem:[#allocation5 + $0x2c] sm:$0xf]
    %v62 = vld [vmem:[#allocation5 + $0x30] sm:$0xf]
    %v63 = vld [vmem:[#allocation5 + $0x34] sm:$0xf]
    %v64 = vld [vmem:[#allocation5 + $0x38] sm:$0xf]
    %v65 = vld [vmem:[#allocation5 + $0x3c] sm:$0xf]
    %v82 = vunpack.c.l.b16 %v50
    %v83 = vunpack.c.l.b16 %v51
    %v84 = vunpack.c.l.b16 %v52
    %v85 = vunpack.c.l.b16 %v53
    %v86 = vunpack.c.l.b16 %v54
    %v87 = vunpack.c.l.b16 %v55
    %v88 = vunpack.c.l.b16 %v56
    %v89 = vunpack.c.l.b16 %v57
    %v90 = vunpack.c.l.b16 %v58
    %v91 = vunpack.c.l.b16 %v59
    %v92 = vunpack.c.l.b16 %v60
    %v93 = vunpack.c.l.b16 %v61
    %v94 = vunpack.c.l.b16 %v62
    %v95 = vunpack.c.l.b16 %v63
    %v96 = vunpack.c.l.b16 %v64
    %v97 = vunpack.c.l.b16 %v65
    %v98 = vpack.c.b16 %v83, %v82
    %v99 = vpack.c.b16 %v85, %v84
    %v100 = vpack.c.b16 %v87, %v86
    %v101 = vpack.c.b16 %v89, %v88
    %v102 = vpack.c.b16 %v91, %v90
    %v103 = vpack.c.b16 %v93, %v92
    %v104 = vpack.c.b16 %v95, %v94
    %v105 = vpack.c.b16 %v97, %v96
    %114 = vmatpush.bf16.msra.mxu0 %v105
    %115 = vmatpush.bf16.msra.mxu0 %v104
    %116 = vmatpush.bf16.msra.mxu0 %v103
    %117 = vmatpush.bf16.msra.mxu0 %v102
    %118 = vmatpush.bf16.msra.mxu0 %v101
    %119 = vmatpush.bf16.msra.mxu0 %v100
    %120 = vmatpush.bf16.msra.mxu0 %v99
    %121 = vmatpush.bf16.msra.mxu0 %v98
    %122 = vmatmul.bf16.gmra.mxu0 %v49
    %v123 = vpop.f32.mrf.mxu0
    %v124 = vadd.f32 0.0, %v123
    %v125 = vpop.f32.mrf.mxu0
    %126 = vdwg.mxu0
    %v127 = vpack.c.bf16 %v124, %v124
    %v128 = vunpack.c.l.bf16 %v127
    %vm129 = vcmp.gt.f32.partialorder %v128, 0.0
    %v130 = vmul.f32 %v128, 0.010009766
    %v131 = vpack.c.bf16 %v130, %v130
    %vm132 = vmpackc.low %vm129, %vm129
    %v133 = vsel %vm132, %v127, %v131
    %s134 = scalar_lea.vmem [#allocation5], 64
    %v135 = vld [vmem:[%s134] sm:$0xf]
    %v136 = vld [vmem:[%s134 + $0x4] sm:$0xf]
    %v137 = vld [vmem:[%s134 + $0x8] sm:$0xf]
    %v138 = vld [vmem:[%s134 + $0xc] sm:$0xf]
    %v139 = vld [vmem:[%s134 + $0x10] sm:$0xf]
    %v140 = vld [vmem:[%s134 + $0x14] sm:$0xf]
    %v141 = vld [vmem:[%s134 + $0x18] sm:$0xf]
    %v142 = vld [vmem:[%s134 + $0x1c] sm:$0xf]
    %v143 = vld [vmem:[%s134 + $0x20] sm:$0xf]
    %v144 = vld [vmem:[%s134 + $0x24] sm:$0xf]
    %v145 = vld [vmem:[%s134 + $0x28] sm:$0xf]
    %v146 = vld [vmem:[%s134 + $0x2c] sm:$0xf]
    %v147 = vld [vmem:[%s134 + $0x30] sm:$0xf]
    %v148 = vld [vmem:[%s134 + $0x34] sm:$0xf]
    %v149 = vld [vmem:[%s134 + $0x38] sm:$0xf]
    %v150 = vld [vmem:[%s134 + $0x3c] sm:$0xf]
    %v167 = vunpack.c.l.b16 %v135
    %v168 = vunpack.c.l.b16 %v136
    %v169 = vunpack.c.l.b16 %v137
    %v170 = vunpack.c.l.b16 %v138
    %v171 = vunpack.c.l.b16 %v139
    %v172 = vunpack.c.l.b16 %v140
    %v173 = vunpack.c.l.b16 %v141
    %v174 = vunpack.c.l.b16 %v142
    %v175 = vunpack.c.l.b16 %v143
    %v176 = vunpack.c.l.b16 %v144
    %v177 = vunpack.c.l.b16 %v145
    %v178 = vunpack.c.l.b16 %v146
    %v179 = vunpack.c.l.b16 %v147
    %v180 = vunpack.c.l.b16 %v148
    %v181 = vunpack.c.l.b16 %v149
    %v182 = vunpack.c.l.b16 %v150
    %v183 = vpack.c.b16 %v168, %v167
    %v184 = vpack.c.b16 %v170, %v169
    %v185 = vpack.c.b16 %v172, %v171
    %v186 = vpack.c.b16 %v174, %v173
    %v187 = vpack.c.b16 %v176, %v175
    %v188 = vpack.c.b16 %v178, %v177
    %v189 = vpack.c.b16 %v180, %v179
    %v190 = vpack.c.b16 %v182, %v181
    %199 = vmatpush.bf16.msra.mxu0 %v190
    %200 = vmatpush.bf16.msra.mxu0 %v189
    %201 = vmatpush.bf16.msra.mxu0 %v188
    %202 = vmatpush.bf16.msra.mxu0 %v187
    %203 = vmatpush.bf16.msra.mxu0 %v186
    %204 = vmatpush.bf16.msra.mxu0 %v185
    %205 = vmatpush.bf16.msra.mxu0 %v184
    %206 = vmatpush.bf16.msra.mxu0 %v183
    %207 = vmatmul.bf16.gmra.mxu0 %v133
    %v208 = vpop.f32.mrf.mxu0
    %v209 = vadd.f32 0.0, %v208
    %v210 = vpop.f32.mrf.mxu0
    %211 = vdwg.mxu0
    %v212 = vpack.c.bf16 %v209, %v209
    %v213 = vunpack.c.l.bf16 %v212
    %vm214 = vcmp.gt.f32.partialorder %v213, 0.0
    %v215 = vmul.f32 %v213, 0.010009766
    %v216 = vpack.c.bf16 %v215, %v215
    %vm217 = vmpackc.low %vm214, %vm214
    %v218 = vsel %vm217, %v212, %v216
    %s219 = scalar_lea.vmem [#allocation5], 128
    %v220 = vld [vmem:[%s219] sm:$0xf]
    %v221 = vld [vmem:[%s219 + $0x4] sm:$0xf]
    %v222 = vld [vmem:[%s219 + $0x8] sm:$0xf]
    %v223 = vld [vmem:[%s219 + $0xc] sm:$0xf]
    %v224 = vld [vmem:[%s219 + $0x10] sm:$0xf]
    %v225 = vld [vmem:[%s219 + $0x14] sm:$0xf]
    %v226 = vld [vmem:[%s219 + $0x18] sm:$0xf]
    %v227 = vld [vmem:[%s219 + $0x1c] sm:$0xf]
    %v228 = vld [vmem:[%s219 + $0x20] sm:$0xf]
    %v229 = vld [vmem:[%s219 + $0x24] sm:$0xf]
    %v230 = vld [vmem:[%s219 + $0x28] sm:$0xf]
    %v231 = vld [vmem:[%s219 + $0x2c] sm:$0xf]
    %v232 = vld [vmem:[%s219 + $0x30] sm:$0xf]
    %v233 = vld [vmem:[%s219 + $0x34] sm:$0xf]
    %v234 = vld [vmem:[%s219 + $0x38] sm:$0xf]
    %v235 = vld [vmem:[%s219 + $0x3c] sm:$0xf]
    %v252 = vunpack.c.l.b16 %v220
    %v253 = vunpack.c.l.b16 %v221
    %v254 = vunpack.c.l.b16 %v222
    %v255 = vunpack.c.l.b16 %v223
    %v256 = vunpack.c.l.b16 %v224
    %v257 = vunpack.c.l.b16 %v225
    %v258 = vunpack.c.l.b16 %v226
    %v259 = vunpack.c.l.b16 %v227
    %v260 = vunpack.c.l.b16 %v228
    %v261 = vunpack.c.l.b16 %v229
    %v262 = vunpack.c.l.b16 %v230
    %v263 = vunpack.c.l.b16 %v231
    %v264 = vunpack.c.l.b16 %v232
    %v265 = vunpack.c.l.b16 %v233
    %v266 = vunpack.c.l.b16 %v234
    %v267 = vunpack.c.l.b16 %v235
    %v268 = vpack.c.b16 %v253, %v252
    %v269 = vpack.c.b16 %v255, %v254
    %v270 = vpack.c.b16 %v257, %v256
    %v271 = vpack.c.b16 %v259, %v258
    %v272 = vpack.c.b16 %v261, %v260
    %v273 = vpack.c.b16 %v263, %v262
    %v274 = vpack.c.b16 %v265, %v264
    %v275 = vpack.c.b16 %v267, %v266
    %284 = vmatpush.bf16.msra.mxu0 %v275
    %285 = vmatpush.bf16.msra.mxu0 %v274
    %286 = vmatpush.bf16.msra.mxu0 %v273
    %287 = vmatpush.bf16.msra.mxu0 %v272
    %288 = vmatpush.bf16.msra.mxu0 %v271
    %289 = vmatpush.bf16.msra.mxu0 %v270
    %290 = vmatpush.bf16.msra.mxu0 %v269
    %291 = vmatpush.bf16.msra.mxu0 %v268
    %292 = vmatmul.bf16.gmra.mxu0 %v218
    %v293 = vpop.f32.mrf.mxu0
    %v294 = vadd.f32 0.0, %v293
    %v295 = vpop.f32.mrf.mxu0
    %296 = vdwg.mxu0
    %v297 = vpack.c.bf16 %v294, %v294
    %v298 = vunpack.c.l.bf16 %v297
    %vm299 = vcmp.gt.f32.partialorder %v298, 0.0
    %v300 = vmul.f32 %v298, 0.010009766
    %v301 = vpack.c.bf16 %v300, %v300
    %vm302 = vmpackc.low %vm299, %vm299
    %v303 = vsel %vm302, %v297, %v301
    %s304 = scalar_lea.vmem [#allocation5], 192
    %v305 = vld [vmem:[%s304] sm:$0xf]
    %v306 = vld [vmem:[%s304 + $0x4] sm:$0xf]
    %v307 = vld [vmem:[%s304 + $0x8] sm:$0xf]
    %v308 = vld [vmem:[%s304 + $0xc] sm:$0xf]
    %v309 = vld [vmem:[%s304 + $0x10] sm:$0xf]
    %v310 = vld [vmem:[%s304 + $0x14] sm:$0xf]
    %v311 = vld [vmem:[%s304 + $0x18] sm:$0xf]
    %v312 = vld [vmem:[%s304 + $0x1c] sm:$0xf]
    %v313 = vld [vmem:[%s304 + $0x20] sm:$0xf]
    %v314 = vld [vmem:[%s304 + $0x24] sm:$0xf]
    %v315 = vld [vmem:[%s304 + $0x28] sm:$0xf]
    %v316 = vld [vmem:[%s304 + $0x2c] sm:$0xf]
    %v317 = vld [vmem:[%s304 + $0x30] sm:$0xf]
    %v318 = vld [vmem:[%s304 + $0x34] sm:$0xf]
    %v319 = vld [vmem:[%s304 + $0x38] sm:$0xf]
    %v320 = vld [vmem:[%s304 + $0x3c] sm:$0xf]
    %v337 = vunpack.c.l.b16 %v305
    %v338 = vunpack.c.l.b16 %v306
    %v339 = vunpack.c.l.b16 %v307
    %v340 = vunpack.c.l.b16 %v308
    %v341 = vunpack.c.l.b16 %v309
    %v342 = vunpack.c.l.b16 %v310
    %v343 = vunpack.c.l.b16 %v311
    %v344 = vunpack.c.l.b16 %v312
    %v345 = vunpack.c.l.b16 %v313
    %v346 = vunpack.c.l.b16 %v314
    %v347 = vunpack.c.l.b16 %v315
    %v348 = vunpack.c.l.b16 %v316
    %v349 = vunpack.c.l.b16 %v317
    %v350 = vunpack.c.l.b16 %v318
    %v351 = vunpack.c.l.b16 %v319
    %v352 = vunpack.c.l.b16 %v320
    %v353 = vpack.c.b16 %v338, %v337
    %v354 = vpack.c.b16 %v340, %v339
    %v355 = vpack.c.b16 %v342, %v341
    %v356 = vpack.c.b16 %v344, %v343
    %v357 = vpack.c.b16 %v346, %v345
    %v358 = vpack.c.b16 %v348, %v347
    %v359 = vpack.c.b16 %v350, %v349
    %v360 = vpack.c.b16 %v352, %v351
    %369 = vmatpush.bf16.msra.mxu0 %v360
    %370 = vmatpush.bf16.msra.mxu0 %v359
    %371 = vmatpush.bf16.msra.mxu0 %v358
    %372 = vmatpush.bf16.msra.mxu0 %v357
    %373 = vmatpush.bf16.msra.mxu0 %v356
    %374 = vmatpush.bf16.msra.mxu0 %v355
    %375 = vmatpush.bf16.msra.mxu0 %v354
    %376 = vmatpush.bf16.msra.mxu0 %v353
    %377 = vmatmul.bf16.gmra.mxu0 %v303
    %v378 = vpop.f32.mrf.mxu0
    %v379 = vadd.f32 0.0, %v378
    %v380 = vpop.f32.mrf.mxu0
    %381 = vdwg.mxu0
    %v382 = vpack.c.bf16 %v379, %v379
    %v383 = vunpack.c.l.bf16 %v382
    %vm384 = vcmp.gt.f32.partialorder %v383, 0.0
    %v385 = vmul.f32 %v383, 0.010009766
    %v386 = vpack.c.bf16 %v385, %v385
    %vm387 = vmpackc.low %vm384, %vm384
    %v388 = vsel %vm387, %v382, %v386
    %s389 = scalar_lea.vmem [#allocation5], 256
    %v390 = vld [vmem:[%s389] sm:$0xf]
    %v391 = vld [vmem:[%s389 + $0x4] sm:$0xf]
    %v392 = vld [vmem:[%s389 + $0x8] sm:$0xf]
    %v393 = vld [vmem:[%s389 + $0xc] sm:$0xf]
    %v394 = vld [vmem:[%s389 + $0x10] sm:$0xf]
    %v395 = vld [vmem:[%s389 + $0x14] sm:$0xf]
    %v396 = vld [vmem:[%s389 + $0x18] sm:$0xf]
    %v397 = vld [vmem:[%s389 + $0x1c] sm:$0xf]
    %v398 = vld [vmem:[%s389 + $0x20] sm:$0xf]
    %v399 = vld [vmem:[%s389 + $0x24] sm:$0xf]
    %v400 = vld [vmem:[%s389 + $0x28] sm:$0xf]
    %v401 = vld [vmem:[%s389 + $0x2c] sm:$0xf]
    %v402 = vld [vmem:[%s389 + $0x30] sm:$0xf]
    %v403 = vld [vmem:[%s389 + $0x34] sm:$0xf]
    %v404 = vld [vmem:[%s389 + $0x38] sm:$0xf]
    %v405 = vld [vmem:[%s389 + $0x3c] sm:$0xf]
    %v422 = vunpack.c.l.b16 %v390
    %v423 = vunpack.c.l.b16 %v391
    %v424 = vunpack.c.l.b16 %v392
    %v425 = vunpack.c.l.b16 %v393
    %v426 = vunpack.c.l.b16 %v394
    %v427 = vunpack.c.l.b16 %v395
    %v428 = vunpack.c.l.b16 %v396
    %v429 = vunpack.c.l.b16 %v397
    %v430 = vunpack.c.l.b16 %v398
    %v431 = vunpack.c.l.b16 %v399
    %v432 = vunpack.c.l.b16 %v400
    %v433 = vunpack.c.l.b16 %v401
    %v434 = vunpack.c.l.b16 %v402
    %v435 = vunpack.c.l.b16 %v403
    %v436 = vunpack.c.l.b16 %v404
    %v437 = vunpack.c.l.b16 %v405
    %v438 = vpack.c.b16 %v423, %v422
    %v439 = vpack.c.b16 %v425, %v424
    %v440 = vpack.c.b16 %v427, %v426
    %v441 = vpack.c.b16 %v429, %v428
    %v442 = vpack.c.b16 %v431, %v430
    %v443 = vpack.c.b16 %v433, %v432
    %v444 = vpack.c.b16 %v435, %v434
    %v445 = vpack.c.b16 %v437, %v436
    %454 = vmatpush.bf16.msra.mxu0 %v445
    %455 = vmatpush.bf16.msra.mxu0 %v444
    %456 = vmatpush.bf16.msra.mxu0 %v443
    %457 = vmatpush.bf16.msra.mxu0 %v442
    %458 = vmatpush.bf16.msra.mxu0 %v441
    %459 = vmatpush.bf16.msra.mxu0 %v440
    %460 = vmatpush.bf16.msra.mxu0 %v439
    %461 = vmatpush.bf16.msra.mxu0 %v438
    %462 = vmatmul.bf16.gmra.mxu0 %v388
    %v463 = vpop.f32.mrf.mxu0
    %v464 = vadd.f32 0.0, %v463
    %v465 = vpop.f32.mrf.mxu0
    %466 = vdwg.mxu0
    %v467 = vpack.c.bf16 %v464, %v464
    %v468 = vunpack.c.l.bf16 %v467
    %vm469 = vcmp.gt.f32.partialorder %v468, 0.0
    %v470 = vmul.f32 %v468, 0.010009766
    %v471 = vpack.c.bf16 %v470, %v470
    %vm472 = vmpackc.low %vm469, %vm469
    %v473 = vsel %vm472, %v467, %v471
    %s474 = scalar_lea.vmem [#allocation5], 320
    %v475 = vld [vmem:[%s474] sm:$0xf]
    %v476 = vld [vmem:[%s474 + $0x4] sm:$0xf]
    %v477 = vld [vmem:[%s474 + $0x8] sm:$0xf]
    %v478 = vld [vmem:[%s474 + $0xc] sm:$0xf]
    %v479 = vld [vmem:[%s474 + $0x10] sm:$0xf]
    %v480 = vld [vmem:[%s474 + $0x14] sm:$0xf]
    %v481 = vld [vmem:[%s474 + $0x18] sm:$0xf]
    %v482 = vld [vmem:[%s474 + $0x1c] sm:$0xf]
    %v483 = vld [vmem:[%s474 + $0x20] sm:$0xf]
    %v484 = vld [vmem:[%s474 + $0x24] sm:$0xf]
    %v485 = vld [vmem:[%s474 + $0x28] sm:$0xf]
    %v486 = vld [vmem:[%s474 + $0x2c] sm:$0xf]
    %v487 = vld [vmem:[%s474 + $0x30] sm:$0xf]
    %v488 = vld [vmem:[%s474 + $0x34] sm:$0xf]
    %v489 = vld [vmem:[%s474 + $0x38] sm:$0xf]
    %v490 = vld [vmem:[%s474 + $0x3c] sm:$0xf]
    %v507 = vunpack.c.l.b16 %v475
    %v508 = vunpack.c.l.b16 %v476
    %v509 = vunpack.c.l.b16 %v477
    %v510 = vunpack.c.l.b16 %v478
    %v511 = vunpack.c.l.b16 %v479
    %v512 = vunpack.c.l.b16 %v480
    %v513 = vunpack.c.l.b16 %v481
    %v514 = vunpack.c.l.b16 %v482
    %v515 = vunpack.c.l.b16 %v483
    %v516 = vunpack.c.l.b16 %v484
    %v517 = vunpack.c.l.b16 %v485
    %v518 = vunpack.c.l.b16 %v486
    %v519 = vunpack.c.l.b16 %v487
    %v520 = vunpack.c.l.b16 %v488
    %v521 = vunpack.c.l.b16 %v489
    %v522 = vunpack.c.l.b16 %v490
    %v523 = vpack.c.b16 %v508, %v507
    %v524 = vpack.c.b16 %v510, %v509
    %v525 = vpack.c.b16 %v512, %v511
    %v526 = vpack.c.b16 %v514, %v513
    %v527 = vpack.c.b16 %v516, %v515
    %v528 = vpack.c.b16 %v518, %v517
    %v529 = vpack.c.b16 %v520, %v519
    %v530 = vpack.c.b16 %v522, %v521
    %539 = vmatpush.bf16.msra.mxu0 %v530
    %540 = vmatpush.bf16.msra.mxu0 %v529
    %541 = vmatpush.bf16.msra.mxu0 %v528
    %542 = vmatpush.bf16.msra.mxu0 %v527
    %543 = vmatpush.bf16.msra.mxu0 %v526
    %544 = vmatpush.bf16.msra.mxu0 %v525
    %545 = vmatpush.bf16.msra.mxu0 %v524
    %546 = vmatpush.bf16.msra.mxu0 %v523
    %547 = vmatmul.bf16.gmra.mxu0 %v473
    %v548 = vpop.f32.mrf.mxu0
    %v549 = vadd.f32 0.0, %v548
    %v550 = vpop.f32.mrf.mxu0
    %551 = vdwg.mxu0
    %v552 = vsub.f32 0.0, %v549
    %v553 = vmul.f32 %v552, 1.442695
    %v554 = vpow.pop %v553
    %v555 = vadd.f32 %v554, 1.0
    %v556 = vrcp.pop %v555
    %557 = vst.msk [vmem:[#allocation7] sm:$0xff] %vm43, %v556
    // Predicated region
    $region18: #{enhanced_autoencoder.1} parent=1 // pred_check
      _
    $region19: #{enhanced_autoencoder.1} parent=1 // pred_check_branch
      %559 = sbr.rel (0) target = $region21
    $region20: #{enhanced_autoencoder.1} parent=1 // pred_region
      %561 = vsyncadd [#allocation4], 0
      %s563 = sshll.u32 [#allocation7], 4
      %s564 = int_to_ptr.vmem [resolvable:$true] %s563
      %s565 = sshll.u32 %s2, 4
      %s566 = int_to_ptr.hbm [resolvable:$true] %s565
      %568 = dma.vmem_to_hbm [thread:$0]  %s564, 128, %s566, [#allocation4]
    $region21: #{enhanced_autoencoder.1} parent=1 // pred_fallthru
      _
    // Predicated region
    $region22: #{enhanced_autoencoder.1} parent=1 // pred_check
      _
    $region23: #{enhanced_autoencoder.1} parent=1 // pred_check_branch
      %570 = sbr.rel (0) target = $region25
    $region24: #{enhanced_autoencoder.1} parent=1 // pred_region
      %572 = dma.done [#allocation4], 128
    $region25: #{enhanced_autoencoder.1} parent=1 // pred_fallthru
      _
    %573 = vsyncpa [#allocation3], 1
    %574 = vsyncpa [#allocation6], 1
    %575 = vsyncpa [#allocation4], 1

</llo_original>
